<compile_context>
chip_gen: v6e
topology: v6e:2x2x1
jax: 0.10.0
libtpu: 0.0.40
codegen_flags: <defaults>
</compile_context>

<pallas_src>
import functools

import jax
import jax.numpy as jnp
from jax.experimental import pallas as pl
from jax.experimental.pallas import tpu as pltpu

_LANES = 128
_SUBLANES = 8


def _round_up(x, m):
    return ((x + m - 1) // m) * m


def _mse_loss_kernel(x_ref, t_ref, w_ref, o_ref, acc_sse_ref, acc_reg_ref, *,
                     n_x_tiles, n_w_tiles, numel_x, numel_w,
                     inv_numel, reg_weight, a, c4, c2, c0,
                     mask_x, mask_w):
    i = pl.program_id(0)

    @pl.when(i == 0)
    def _():
        acc_sse_ref[...] = jnp.zeros_like(acc_sse_ref)
        acc_reg_ref[...] = jnp.zeros_like(acc_reg_ref)

    # ---- squared-error stream (pure VPU, lane-dense) -------------------------
    @pl.when(i < n_x_tiles)
    def _():
        d = x_ref[...].astype(jnp.float32) - t_ref[...].astype(jnp.float32)
        sq = d * d
        if mask_x:  # static: only when the last tile is ragged
            tm = x_ref.shape[0]
            row = jax.lax.broadcasted_iota(jnp.int32, (tm, _LANES), 0) + i * tm
            lane = jax.lax.broadcasted_iota(jnp.int32, (tm, _LANES), 1)
            sq = jnp.where(row * _LANES + lane < numel_x, sq, 0.0)
        acc_sse_ref[...] += sq

    # ---- smooth-L1/2 regularization stream (VPU + EUP sqrt) ------------------
    @pl.when(i < n_w_tiles)
    def _():
        w = w_ref[...].astype(jnp.float32)
        aw = jnp.abs(w)
        w2 = w * w
        smooth = jnp.where(aw < a, w2 * w2 * c4 + w2 * c2 + c0, aw)
        val = jnp.sqrt(smooth)
        if mask_w:  # static: ragged last tile and/or zero-padded tail elements
            tw = w_ref.shape[0]
            row = jax.lax.broadcasted_iota(jnp.int32, (tw, _LANES), 0) + i * tw
            lane = jax.lax.broadcasted_iota(jnp.int32, (tw, _LANES), 1)
            val = jnp.where(row * _LANES + lane < numel_w, val, 0.0)
        acc_reg_ref[...] += val

    # ---- finalize: two cross-lane reduces + scalar SMEM store ----------------
    @pl.when(i == pl.num_programs(0) - 1)
    def _():
        sse = jnp.sum(acc_sse_ref[...])
        reg = jnp.sum(acc_reg_ref[...])
        o_ref[0] = sse * inv_numel + reg_weight * reg


def _to_slab(flat):
    """(N,) -> (rows, 128) lane-dense slab with rows % 8 == 0.

    Pads (zero) only when N % 1024 != 0 — the minimum needed to reshape.
    Returns (slab, original_numel)."""
    n = flat.size
    pad = (-n) % (_LANES * _SUBLANES)
    if pad:
        flat = jnp.pad(flat, (0, pad))
    return flat.reshape(-1, _LANES), n


def mse_loss_pallas(inp, target, weights, reg_weight, a=0.05, *,
                    max_block_rows=2048):
    assert inp.shape == target.shape
    assert a > 0.0, "smooth-abs formula requires a > 0"
    assert max_block_rows % _SUBLANES == 0

    # --- lane-dense slabs (padding zeros contribute 0 to SSE) -----------------
    x2d, numel_x = _to_slab(jnp.ravel(inp))
    t2d, _ = _to_slab(jnp.ravel(target))
    rows_x = x2d.shape[0]

    if isinstance(weights, (list, tuple)):
        wflat = jnp.concatenate([jnp.ravel(w) for w in weights])
    else:
        wflat = jnp.ravel(weights)
    w2d, numel_w = _to_slab(wflat)
    rows_w = w2d.shape[0]

    # --- tile selection: cdiv grid, no tile-collapse fallback -----------------
    tm = min(max_block_rows, rows_x)
    tw = min(max_block_rows, rows_w)
    n_x_tiles = pl.cdiv(rows_x, tm)
    n_w_tiles = pl.cdiv(rows_w, tw)
    n_steps = max(n_x_tiles, n_w_tiles)

    # static mask flags: ragged last tile and/or padded tail elements
    mask_x = (rows_x % tm) != 0                       # pad zeros already give d=0
    mask_w = ((rows_w % tw) != 0) or (rows_w * _LANES != numel_w)

    a = float(a)
    kernel = functools.partial(
        _mse_loss_kernel,
        n_x_tiles=n_x_tiles, n_w_tiles=n_w_tiles,
        numel_x=numel_x, numel_w=numel_w,
        inv_numel=1.0 / float(numel_x),
        reg_weight=float(reg_weight),
        a=a,
        c4=1.0 / (-8.0 * a ** 3),
        c2=3.0 / (4.0 * a),
        c0=3.0 * a / 8.0,
        mask_x=mask_x, mask_w=mask_w,
    )

    cost = pl.CostEstimate(
        flops=int(3 * numel_x + 7 * numel_w),
        transcendentals=int(numel_w),
        bytes_accessed=int(x2d.nbytes + t2d.nbytes + w2d.nbytes + 4),
    )

    out = pl.pallas_call(
        kernel,
        out_shape=jax.ShapeDtypeStruct((1,), jnp.float32),
        grid_spec=pltpu.PrefetchScalarGridSpec(
            num_scalar_prefetch=0,
            grid=(n_steps,),
            in_specs=[
                # input / target tiles (clamped index -> no refetch past the end)
                pl.BlockSpec((tm, _LANES),
                             lambda i: (jnp.minimum(i, n_x_tiles - 1), 0)),
                pl.BlockSpec((tm, _LANES),
                             lambda i: (jnp.minimum(i, n_x_tiles - 1), 0)),
                # weight tiles folded into the same grid loop
                pl.BlockSpec((tw, _LANES),
                             lambda i: (jnp.minimum(i, n_w_tiles - 1), 0)),
            ],
            out_specs=pl.BlockSpec(memory_space=pltpu.SMEM),      # 1-D scalar loss
            scratch_shapes=[
                pltpu.VMEM((tm, _LANES), jnp.float32),   # vector SSE accumulator
                pltpu.VMEM((tw, _LANES), jnp.float32),   # vector reg accumulator
            ],
        ),
        compiler_params=pltpu.CompilerParams(
            # reduction axis: must stay "arbitrary" (no cross-core sharding)
            dimension_semantics=("arbitrary",),
        ),
        cost_estimate=cost,
    )(x2d, t2d, w2d)
    return out[0]


def mse_loss_ref(inp, target, weights, reg_weight, a=0.05):
    err = jnp.mean((inp.astype(jnp.float32) - target.astype(jnp.float32)) ** 2)
    if isinstance(weights, (list, tuple)):
        wflat = jnp.concatenate([jnp.ravel(w) for w in weights])
    else:
        wflat = jnp.ravel(weights)
    w = wflat.astype(jnp.float32)
    aw = jnp.abs(w)
    smooth = jnp.where(
        aw < a,
        (w ** 4) / (-8.0 * a ** 3) + (w * w) * 3.0 / 4.0 / a + 3.0 * a / 8.0,
        aw,
    )
    reg = jnp.sum(jnp.sqrt(smooth))
    return err + reg_weight * reg


if __name__ == "__main__":
    key = jax.random.PRNGKey(0)
    k1, k2, k3, k4, k5 = jax.random.split(key, 5)

    # predictions / targets: NCHW [2, 4, 16, 16]
    x = jax.random.normal(k1, (2, 4, 16, 16), dtype=jnp.float32)
    t = jax.random.normal(k2, (2, 4, 16, 16), dtype=jnp.float32)
    # synthetic "sym" weights; small values so both branches of the smooth-abs
    # where() are exercised
    w = 0.1 * jax.random.normal(k3, (32, 32), dtype=jnp.float32)
    reg_weight = 0.01

    # 1) single-tensor weights, single-tile grid
    loss = jax.block_until_ready(mse_loss_pallas(x, t, w, reg_weight, a=0.05))
    ref = mse_loss_ref(x, t, w, reg_weight, a=0.05)
    assert jnp.allclose(loss, ref, rtol=1e-5, atol=1e-5), (loss, ref)

    # 2) multi-step grid path (clamped weight index map + pl.when gating)
    loss2 = jax.block_until_ready(
        mse_loss_pallas(x, t, w, reg_weight, a=0.05, max_block_rows=8))
    assert jnp.allclose(loss2, ref, rtol=1e-5, atol=1e-5), (loss2, ref)

    # 3) list-of-weights with ragged sizes (exercises in-kernel tail mask)
    ws = [0.1 * jax.random.normal(k4, (30, 30), dtype=jnp.float32),
          0.3 * jax.random.normal(k5, (7, 13), dtype=jnp.float32)]
    loss3 = jax.block_until_ready(mse_loss_pallas(x, t, ws, reg_weight, a=0.05))
    ref3 = mse_loss_ref(x, t, ws, reg_weight, a=0.05)
    assert jnp.allclose(loss3, ref3, rtol=1e-5, atol=1e-5), (loss3, ref3)

    print("KERNEL_OK")
</pallas_src>

<mosaic_0001>
module attributes {stable_mosaic.version = 11 : i64} {
  func.func @_mse_loss_kernel(%arg0: i32, %arg1: memref<16x128xf32, #tpu.memory_space<vmem>>, %arg2: memref<16x128xf32, #tpu.memory_space<vmem>>, %arg3: memref<8x128xf32, #tpu.memory_space<vmem>>, %arg4: memref<1xf32, #tpu.memory_space<smem>>, %arg5: memref<16x128xf32, #tpu.memory_space<vmem>>, %arg6: memref<8x128xf32, #tpu.memory_space<vmem>>) attributes {dimension_semantics = [#tpu.dimension_semantics<arbitrary>], iteration_bounds = array<i64: 1>, scalar_prefetch = 0 : i64, scratch_operands = 2 : i64, tpu.core_type = #tpu.core_type<tc>, window_params = [{transform_indices = @transform_0, window_bounds = array<i64: 16, 128>}, {transform_indices = @transform_1, window_bounds = array<i64: 16, 128>}, {transform_indices = @transform_2, window_bounds = array<i64: 8, 128>}, {transform_indices = @transform_3, window_bounds = array<i64: 1>}]} {
    %c0_i32 = arith.constant 0 : i32
    %0 = arith.cmpi eq, %arg0, %c0_i32 : i32
    %1 = arith.extui %0 : i1 to i32
    %c0_i32_0 = arith.constant 0 : i32
    %2 = arith.cmpi ne, %1, %c0_i32_0 : i32
    scf.if %2 {
      %cst = arith.constant 0.000000e+00 : f32
      %12 = vector.broadcast %cst : f32 to vector<16x128xf32>
      %c0 = arith.constant 0 : index
      %c0_6 = arith.constant 0 : index
      %13 = vector.load %arg5[%c0, %c0_6] : memref<16x128xf32, #tpu.memory_space<vmem>>, vector<16x128xf32>
      tpu.vector_store %arg5[%c0, %c0_6], %12 {strides = array<i32>} : memref<16x128xf32, #tpu.memory_space<vmem>>, vector<16x128xf32>,
      %cst_7 = arith.constant 0.000000e+00 : f32
      %14 = vector.broadcast %cst_7 : f32 to vector<8x128xf32>
      %c0_8 = arith.constant 0 : index
      %c0_9 = arith.constant 0 : index
      %15 = vector.load %arg6[%c0_8, %c0_9] : memref<8x128xf32, #tpu.memory_space<vmem>>, vector<8x128xf32>
      tpu.vector_store %arg6[%c0_8, %c0_9], %14 {strides = array<i32>} : memref<8x128xf32, #tpu.memory_space<vmem>>, vector<8x128xf32>,
    } else {
    }
    %c1_i32 = arith.constant 1 : i32
    %3 = arith.cmpi slt, %arg0, %c1_i32 : i32
    %4 = arith.extui %3 : i1 to i32
    %c0_i32_1 = arith.constant 0 : i32
    %5 = arith.cmpi ne, %4, %c0_i32_1 : i32
    scf.if %5 {
      %c0 = arith.constant 0 : index
      %c0_6 = arith.constant 0 : index
      %12 = vector.load %arg1[%c0, %c0_6] : memref<16x128xf32, #tpu.memory_space<vmem>>, vector<16x128xf32>
      %c0_7 = arith.constant 0 : index
      %c0_8 = arith.constant 0 : index
      %13 = vector.load %arg2[%c0_7, %c0_8] : memref<16x128xf32, #tpu.memory_space<vmem>>, vector<16x128xf32>
      %14 = arith.subf %12, %13 : vector<16x128xf32>
      %15 = arith.mulf %14, %14 : vector<16x128xf32>
      %c0_9 = arith.constant 0 : index
      %c0_10 = arith.constant 0 : index
      %16 = vector.load %arg5[%c0_9, %c0_10] : memref<16x128xf32, #tpu.memory_space<vmem>>, vector<16x128xf32>
      %17 = arith.addf %16, %15 : vector<16x128xf32>
      %c0_11 = arith.constant 0 : index
      %c0_12 = arith.constant 0 : index
      %18 = vector.load %arg5[%c0_11, %c0_12] : memref<16x128xf32, #tpu.memory_space<vmem>>, vector<16x128xf32>
      tpu.vector_store %arg5[%c0_11, %c0_12], %17 {strides = array<i32>} : memref<16x128xf32, #tpu.memory_space<vmem>>, vector<16x128xf32>,
    } else {
    }
    %c1_i32_2 = arith.constant 1 : i32
    %6 = arith.cmpi slt, %arg0, %c1_i32_2 : i32
    %7 = arith.extui %6 : i1 to i32
    %c0_i32_3 = arith.constant 0 : i32
    %8 = arith.cmpi ne, %7, %c0_i32_3 : i32
    scf.if %8 {
      %c0 = arith.constant 0 : index
      %c0_6 = arith.constant 0 : index
      %12 = vector.load %arg3[%c0, %c0_6] : memref<8x128xf32, #tpu.memory_space<vmem>>, vector<8x128xf32>
      %13 = math.absf %12 : vector<8x128xf32>
      %14 = arith.mulf %12, %12 : vector<8x128xf32>
      %cst = arith.constant 5.000000e-02 : f32
      %15 = vector.broadcast %cst : f32 to vector<8x128xf32>
      %16 = arith.cmpf olt, %13, %15 : vector<8x128xf32>
      %17 = arith.mulf %14, %14 : vector<8x128xf32>
      %cst_7 = arith.constant -1.000000e+03 : f32
      %18 = vector.broadcast %cst_7 : f32 to vector<8x128xf32>
      %19 = arith.mulf %17, %18 : vector<8x128xf32>
      %cst_8 = arith.constant 1.500000e+01 : f32
      %20 = vector.broadcast %cst_8 : f32 to vector<8x128xf32>
      %21 = arith.mulf %14, %20 : vector<8x128xf32>
      %22 = arith.addf %19, %21 : vector<8x128xf32>
      %cst_9 = arith.constant 1.875000e-02 : f32
      %23 = vector.broadcast %cst_9 : f32 to vector<8x128xf32>
      %24 = arith.addf %22, %23 : vector<8x128xf32>
      %25 = arith.select %16, %24, %13 : vector<8x128xi1>, vector<8x128xf32>
      %26 = math.sqrt %25 : vector<8x128xf32>
      %c0_10 = arith.constant 0 : index
      %c0_11 = arith.constant 0 : index
      %27 = vector.load %arg6[%c0_10, %c0_11] : memref<8x128xf32, #tpu.memory_space<vmem>>, vector<8x128xf32>
      %28 = arith.addf %27, %26 : vector<8x128xf32>
      %c0_12 = arith.constant 0 : index
      %c0_13 = arith.constant 0 : index
      %29 = vector.load %arg6[%c0_12, %c0_13] : memref<8x128xf32, #tpu.memory_space<vmem>>, vector<8x128xf32>
      tpu.vector_store %arg6[%c0_12, %c0_13], %28 {strides = array<i32>} : memref<8x128xf32, #tpu.memory_space<vmem>>, vector<8x128xf32>,
    } else {
    }
    %c0_i32_4 = arith.constant 0 : i32
    %9 = arith.cmpi eq, %arg0, %c0_i32_4 : i32
    %10 = arith.extui %9 : i1 to i32
    %c0_i32_5 = arith.constant 0 : i32
    %11 = arith.cmpi ne, %10, %c0_i32_5 : i32
    scf.if %11 {
      %c0 = arith.constant 0 : index
      %c0_6 = arith.constant 0 : index
      %12 = vector.load %arg5[%c0, %c0_6] : memref<16x128xf32, #tpu.memory_space<vmem>>, vector<16x128xf32>
      %13 = vector.shape_cast %12 : vector<16x128xf32> to vector<1x16x128xf32>
      %cst = arith.constant dense<0.000000e+00> : vector<1xf32>
      %14 = vector.multi_reduction <add>, %13, %cst [1, 2] : vector<1x16x128xf32> to vector<1xf32>
      %15 = vector.shape_cast %14 : vector<1xf32> to vector<1x1x1xf32>
      %16 = vector.extract %15[0, 0, 0] : f32 from vector<1x1x1xf32>
      %c0_7 = arith.constant 0 : index
      %c0_8 = arith.constant 0 : index
      %17 = vector.load %arg6[%c0_7, %c0_8] : memref<8x128xf32, #tpu.memory_space<vmem>>, vector<8x128xf32>
      %18 = vector.shape_cast %17 : vector<8x128xf32> to vector<1x8x128xf32>
      %cst_9 = arith.constant dense<0.000000e+00> : vector<1xf32>
      %19 = vector.multi_reduction <add>, %18, %cst_9 [1, 2] : vector<1x8x128xf32> to vector<1xf32>
      %20 = vector.shape_cast %19 : vector<1xf32> to vector<1x1x1xf32>
      %21 = vector.extract %20[0, 0, 0] : f32 from vector<1x1x1xf32>
      %cst_10 = arith.constant 4.8828125E-4 : f32
      %22 = arith.mulf %16, %cst_10 : f32
      %cst_11 = arith.constant 0.00999999977 : f32
      %23 = arith.mulf %cst_11, %21 : f32
      %24 = arith.addf %22, %23 : f32
      %c0_12 = arith.constant 0 : index
      %25 = memref.load %arg4[%c0_12] : memref<1xf32, #tpu.memory_space<smem>>
      memref.store %24, %arg4[%c0_12] : memref<1xf32, #tpu.memory_space<smem>>
    } else {
    }
    return
  }
  func.func @transform_0(%arg0: i32) -> (i32, i32) {
    %c0_i32 = arith.constant 0 : i32
    %0 = arith.minsi %arg0, %c0_i32 : i32
    %c0_i32_0 = arith.constant 0 : i32
    %c0_i32_1 = arith.constant 0 : i32
    return %0, %c0_i32_0 : i32, i32
  }
  func.func @transform_1(%arg0: i32) -> (i32, i32) {
    %c0_i32 = arith.constant 0 : i32
    %0 = arith.minsi %arg0, %c0_i32 : i32
    %c0_i32_0 = arith.constant 0 : i32
    %c0_i32_1 = arith.constant 0 : i32
    return %0, %c0_i32_0 : i32, i32
  }
  func.func @transform_2(%arg0: i32) -> (i32, i32) {
    %c0_i32 = arith.constant 0 : i32
    %0 = arith.minsi %arg0, %c0_i32 : i32
    %c0_i32_0 = arith.constant 0 : i32
    %c0_i32_1 = arith.constant 0 : i32
    return %0, %c0_i32_0 : i32, i32
  }
  func.func @transform_3(%arg0: i32) -> i32 {
    %c0_i32 = arith.constant 0 : i32
    %c0_i32_0 = arith.constant 0 : i32
    return %c0_i32 : i32
  }
}

</mosaic_0001>

<llo_original>
// kernel: tpu_custom_call.1
$region0: #{tpu_custom_call.1}
  #allocation0 [shape = 'u32[]', space=smem, size = 0x4, offset = 0x4, fixed_abs, tag = 'smem constant byte address 0x4 - core index']
  #allocation1 [shape = 'u32[144,128]{1,0:T(1,128)}', space=vmem, size = 0x12000, scoped, tag = 'internal scratch']
  #allocation2 [shape = 'f32[16,128]{1,0:T(8,128)}', space=vmem, size = 0x2000, scoped, tag = 'scratch operand']
  #allocation3 [shape = 'f32[8,128]{1,0:T(8,128)}', space=vmem, size = 0x1000, scoped, tag = 'scratch operand']
  %s0 = inlined_call_operand.hbm [shape: f32[16,128], index: 0, kind: input, shape index: {}]
  %s1 = inlined_call_operand.hbm [shape: f32[16,128], index: 1, kind: input, shape index: {}]
  %s2 = inlined_call_operand.hbm [shape: f32[8,128], index: 2, kind: input, shape index: {}]
  %s3 = inlined_call_operand.hbm [shape: f32[1], index: 3, kind: output, shape index: {}]
  %s4 = sld [smem:[#allocation0]]
  $region46: #{tpu_custom_call.1} parent=0
    _
  %s6 = ssub.s32 1, %s4
  %s7 = scalar_select 0, %s6, %s4
  $region1: #{tpu_custom_call.1} parent=0
    #allocation4 [shape = 'u8[8192]{0}', space=vmem, size = 0x2000, scoped, tag = 'input window, operand 0, single buffered']
    #allocation5 [shape = 's32[1]{0}', space=sflag, size = 0x4, scoped, tag = 'scoped memory for tpu_custom_call.1']
    #allocation6 [shape = 's32[1]{0}', space=sflag, size = 0x4, scoped, tag = 'scoped memory for tpu_custom_call.1']
    #allocation7 [shape = 'u8[8192]{0}', space=vmem, size = 0x2000, scoped, tag = 'input window, operand 1, single buffered']
    #allocation8 [shape = 's32[1]{0}', space=sflag, size = 0x4, scoped, tag = 'scoped memory for tpu_custom_call.1']
    #allocation9 [shape = 'u8[4096]{0}', space=vmem, size = 0x1000, scoped, tag = 'input window, operand 2, single buffered']
    #allocation10 [shape = 'u8[512]{0}', space=smem, size = 0x200, scoped, tag = 'output window, operand 0, single buffered']
    %8 = vsyncpa [#allocation5], 0
    %9 = vsyncpa [#allocation8], 0
    %10 = vsyncpa [#allocation6], 0
    // Predicated region
    $region2: #{tpu_custom_call.1} parent=1 // pred_check
      _
    $region3: #{tpu_custom_call.1} parent=1 // pred_check_branch
      %12 = sbr.rel (0) target = $region5
    $region4: #{tpu_custom_call.1} parent=1 // pred_region
      %s14 = ssub.s32 256, 256
      %15 = vsyncadd [#allocation5], %s14
      %s16 = sshll.u32 [#allocation4], 4
      %s17 = int_to_ptr.vmem [resolvable:$true] %s16
      %22 = dma.hbm_to_vmem [thread:$0]  %s0, 256, %s17, [#allocation5], 128, 128, 8
    $region5: #{tpu_custom_call.1} parent=1 // pred_fallthru
      _
    // Predicated region
    $region6: #{tpu_custom_call.1} parent=1 // pred_check
      _
    $region7: #{tpu_custom_call.1} parent=1 // pred_check_branch
      %24 = sbr.rel (0) target = $region9
    $region8: #{tpu_custom_call.1} parent=1 // pred_region
      %s26 = ssub.s32 256, 256
      %27 = vsyncadd [#allocation8], %s26
      %s28 = sshll.u32 [#allocation7], 4
      %s29 = int_to_ptr.vmem [resolvable:$true] %s28
      %34 = dma.hbm_to_vmem [thread:$0]  %s1, 256, %s29, [#allocation8], 128, 128, 8
    $region9: #{tpu_custom_call.1} parent=1 // pred_fallthru
      _
    // Predicated region
    $region10: #{tpu_custom_call.1} parent=1 // pred_check
      _
    $region11: #{tpu_custom_call.1} parent=1 // pred_check_branch
      %36 = sbr.rel (0) target = $region13
    $region12: #{tpu_custom_call.1} parent=1 // pred_region
      %s38 = ssub.s32 128, 128
      %39 = vsyncadd [#allocation8], %s38
      %s41 = sshll.u32 [#allocation9], 4
      %s42 = int_to_ptr.vmem [resolvable:$true] %s41
      %44 = dma.hbm_to_vmem [thread:$0]  %s2, 128, %s42, [#allocation8]
    $region13: #{tpu_custom_call.1} parent=1 // pred_fallthru
      _
    // Predicated region
    $region14: #{tpu_custom_call.1} parent=1 // pred_check
      _
    $region15: #{tpu_custom_call.1} parent=1 // pred_check_branch
      %46 = sbr.rel (0) target = $region17
    $region16: #{tpu_custom_call.1} parent=1 // pred_region
      %47 = dma.done [#allocation5], 256
    $region17: #{tpu_custom_call.1} parent=1 // pred_fallthru
      _
    // Predicated region
    $region18: #{tpu_custom_call.1} parent=1 // pred_check
      _
    $region19: #{tpu_custom_call.1} parent=1 // pred_check_branch
      %49 = sbr.rel (0) target = $region21
    $region20: #{tpu_custom_call.1} parent=1 // pred_region
      %50 = dma.done [#allocation8], 256
    $region21: #{tpu_custom_call.1} parent=1 // pred_fallthru
      _
    // Predicated region
    $region22: #{tpu_custom_call.1} parent=1 // pred_check
      _
    $region23: #{tpu_custom_call.1} parent=1 // pred_check_branch
      %52 = sbr.rel (0) target = $region25
    $region24: #{tpu_custom_call.1} parent=1 // pred_region
      %53 = dma.done [#allocation8], 128
    $region25: #{tpu_custom_call.1} parent=1 // pred_fallthru
      _
    %p54 = scmp.eq.s32.totalorder 0, 0
    // Predicated region
    $region26: #{tpu_custom_call.1} parent=1 // pred_check
      %p55 = pneg %p54
    $region27: #{tpu_custom_call.1} parent=1 // pred_check_branch
      %57 = sbr.rel (%p55) target = $region29
    $region28: #{tpu_custom_call.1} parent=1 // pred_region
      %58 = vst [vmem:[#allocation2] sm:$0xff] 0.0
      %59 = vst [vmem:[#allocation2 + $0x8] sm:$0xff] 0.0
      %60 = vst [vmem:[#allocation3] sm:$0xff] 0.0
    $region29: #{tpu_custom_call.1} parent=1 // pred_fallthru
      _
    %p61 = scmp.lt.s32.totalorder 0, 1
    // Predicated region
    $region30: #{tpu_custom_call.1} parent=1 // pred_check
      %p62 = pneg %p61
    $region31: #{tpu_custom_call.1} parent=1 // pred_check_branch
      %64 = sbr.rel (%p62) target = $region33
    $region32: #{tpu_custom_call.1} parent=1 // pred_region
      %v65 = vld [vmem:[#allocation4] sm:$0xff]
      %v66 = vld [vmem:[#allocation4 + $0x8] sm:$0xff]
      %v67 = vld [vmem:[#allocation7] sm:$0xff]
      %v68 = vld [vmem:[#allocation7 + $0x8] sm:$0xff]
      %v69 = vsub.f32 %v65, %v67
      %v70 = vsub.f32 %v66, %v68
      %v71 = vmul.f32 %v69, %v69
      %v72 = vmul.f32 %v70, %v70
      %v73 = vld [vmem:[#allocation2] sm:$0xff]
      %v74 = vld [vmem:[#allocation2 + $0x8] sm:$0xff]
      %v75 = vadd.f32 %v73, %v71
      %v76 = vadd.f32 %v74, %v72
      %77 = vst [vmem:[#allocation2] sm:$0xff] %v75
      %78 = vst [vmem:[#allocation2 + $0x8] sm:$0xff] %v76
      %v79 = vld [vmem:[#allocation9] sm:$0xff]
      %v80 = vand.u32 2147483647, %v79
      %v81 = vmul.f32 %v79, %v79
      %vm82 = vcmp.lt.f32.partialorder %v80, 0.05
      %v83 = vmul.f32 %v81, %v81
      %v84 = vmul.f32 %v83, -1000.0
      %v85 = vmul.f32 %v81, 15.0
      %v86 = vadd.f32 %v84, %v85
      %v87 = vadd.f32 %v86, 0.01875
      %v88 = vsel %vm82, %v87, %v80
      %v89 = vrsqrt.pop %v88
      %v90 = vmul.f32 %v88, %v89
      %vm91 = vcmp.eq.f32.partialorder %v88, inf
      %v92 = vsel %vm91, %v88, %v90
      %vm93 = vcmp.eq.f32.partialorder %v88, 0.0
      %v94 = vand.u32 %v88, 2147483648
      %v95 = vsel %vm93, %v94, %v92
      %v96 = vld [vmem:[#allocation3] sm:$0xff]
      %v97 = vadd.f32 %v96, %v95
      %98 = vst [vmem:[#allocation3] sm:$0xff] %v97
    $region33: #{tpu_custom_call.1} parent=1 // pred_fallthru
      _
    // Predicated region
    $region34: #{tpu_custom_call.1} parent=1 // pred_check
      %p99 = pneg %p54
    $region35: #{tpu_custom_call.1} parent=1 // pred_check_branch
      %101 = sbr.rel (%p99) target = $region37
    $region36: #{tpu_custom_call.1} parent=1 // pred_region
      %v102 = vld [vmem:[#allocation2] sm:$0xff]
      %v103 = vld [vmem:[#allocation2 + $0x8] sm:$0xff]
      %v104 = vadd.f32 %v102, %v103
      %105 = vadd.xlane.f32.xlu0 %v104
      %v106 = vpop.xlane.xlu0 %105
      %v107 = vrot.slane %v106, 4
      %v108 = vadd.f32 %v106, %v107
      %v109 = vrot.slane %v108, 2
      %v110 = vadd.f32 %v108, %v109
      %v111 = vrot.slane %v110, 1
      %v112 = vadd.f32 %v110, %v111
      %s113 = vtos %v112
      %v114 = vld [vmem:[#allocation3] sm:$0xff]
      %115 = vadd.xlane.f32.xlu0 %v114
      %v116 = vpop.xlane.xlu0 %115
      %v117 = vrot.slane %v116, 4
      %v118 = vadd.f32 %v116, %v117
      %v119 = vrot.slane %v118, 2
      %v120 = vadd.f32 %v118, %v119
      %v121 = vrot.slane %v120, 1
      %v122 = vadd.f32 %v120, %v121
      %s123 = vtos %v122
      %s124 = smul.f32 %s113, 0.00048828125
      %s125 = smul.f32 %s123, 0.01
      %s126 = sadd.f32 %s124, %s125
      %s127 = scalar_lea.smem [#allocation10], 0
      %128 = sst [smem:[%s127]] %s126
    $region37: #{tpu_custom_call.1} parent=1 // pred_fallthru
      _
    // Predicated region
    $region38: #{tpu_custom_call.1} parent=1 // pred_check
      _
    $region39: #{tpu_custom_call.1} parent=1 // pred_check_branch
      %130 = sbr.rel (0) target = $region41
    $region40: #{tpu_custom_call.1} parent=1 // pred_region
      %s132 = ssub.s32 16, 16
      %133 = vsyncadd [#allocation6], %s132
      %136 = dma.smem_to_hbm [#allocation10], 16, %s3, [#allocation6]
    $region41: #{tpu_custom_call.1} parent=1 // pred_fallthru
      _
    // Predicated region
    $region42: #{tpu_custom_call.1} parent=1 // pred_check
      _
    $region43: #{tpu_custom_call.1} parent=1 // pred_check_branch
      %138 = sbr.rel (0) target = $region45
    $region44: #{tpu_custom_call.1} parent=1 // pred_region
      %139 = dma.done [#allocation6], 16
    $region45: #{tpu_custom_call.1} parent=1 // pred_fallthru
      _
    %140 = sfence
    %141 = vsyncpa [#allocation5], 1
    %142 = vsyncpa [#allocation8], 1
    %143 = vsyncpa [#allocation6], 1

</llo_original>
